<compile_context>
chip_gen: v7x
topology: tpu7x:2x2x1
jax: 0.10.0
libtpu: 0.0.40
codegen_flags: <defaults>
</compile_context>

<pallas_src>
import jax
import jax.numpy as jnp
from jax.experimental import pallas as pl
from jax.experimental.pallas import tpu as pltpu


_HAS_BUFFERED = hasattr(pl, "Buffered")
# Narrow set of errors that indicate "this jax build rejects pipeline_mode",
# without swallowing genuine runtime/XLA execution failures.
_BUFFERED_FALLBACK_ERRORS = (TypeError, ValueError, NotImplementedError,
                             pltpu.LoweringException)


def residual_block_kernel(x_ref, w13_ref, b13_ref, w2_ref, b2_ref, o_ref):
    """Whole residual block for one batch tile, fused in VMEM."""
    hid = w2_ref.shape[0]            # static padded hidden width (multiple of 128)
    x = x_ref[...]
    # Fused first-layer + skip-path matmul: one MXU pass over the shared x tile.
    hs = jnp.dot(x, w13_ref[...], preferred_element_type=jnp.float32) + b13_ref[...]
    h = jnp.maximum(hs[:, :hid], 0.0)          # main-path ReLU (f32, VPU)
    skip = hs[:, hid:]                         # skip-path linear output (f32)
    # Second linear on the main path (operands in compute dtype, f32 accumulate).
    y = jnp.dot(h.astype(w2_ref.dtype), w2_ref[...],
                preferred_element_type=jnp.float32) + b2_ref[...]
    o_ref[...] = (y + skip).astype(o_ref.dtype)


def _round_up(v, m):
    return (v + m - 1) // m * m


def residual_block(x, w1, b1, w2, b2, w3, b3, *,
                   block_m=None,
                   compute_dtype=jnp.bfloat16,
                   x_buffers=2,
                   vmem_limit_bytes=None,
                   vmem_plan_budget=40 * 1024 * 1024):
    """x: (N, input_dim). Weights pre-transposed: w_k is (in, out); b_k is (1, out).

    block_m: optional cap on rows per grid step; None -> auto-sized so each
      step moves ~4 MiB of x+out payload (amortizes grid-step overhead),
      subject to the VMEM plan budget.
    compute_dtype: dtype of the MXU operands (x / weights).  Accumulation,
      biases and the ReLU / skip-add epilogue stay f32.  bfloat16 halves HBM
      traffic and doubles MXU rate on v5e/v6e/v7x; pass jnp.float32 for
      reference-exact results.
    x_buffers: pipeline depth for the streaming x tile (raise to 3 only if a
      trace shows exposed DMA on the x stream).
    vmem_limit_bytes: None -> derived from the actual need, capped at 48 MiB
      (leaves headroom on v7x's 64 MiB/TC; well under v5e/v6e's 128 MiB).
    """
    n, input_dim = x.shape
    hidden_dim = w1.shape[1]
    output_dim = w2.shape[1]
    assert w1.shape == (input_dim, hidden_dim)
    assert w2.shape == (hidden_dim, output_dim)
    assert w3.shape == (input_dim, output_dim)
    assert b1.shape == (1, hidden_dim) and b2.shape == (1, output_dim)
    assert b3.shape == (1, output_dim)

    out_dtype = x.dtype
    compute_dtype = jnp.dtype(compute_dtype)
    csize = compute_dtype.itemsize
    osize = jnp.dtype(out_dtype).itemsize

    # Lane-dense padding: feature axes -> multiples of 128 (unmasked stores,
    # full MXU tiles).
    in_p = _round_up(input_dim, 128)
    hid_p = _round_up(hidden_dim, 128)
    out_p = _round_up(output_dim, 128)

    # ---- VMEM planning (per grid step) -------------------------------------
    # Weights/biases are grid-invariant; plan conservatively as double-buffered
    # (single-buffering via pl.Buffered(1) only reduces actual usage).
    weight_bytes = 2 * ((in_p * (hid_p + out_p) + hid_p * out_p) * csize
                        + (hid_p + 2 * out_p) * 4 * 8)      # bias rows pad to 8
    per_row_bytes = (x_buffers * in_p * csize     # pipelined x tile(s)
                     + 2 * out_p * osize          # double-buffered out tile
                     + (hid_p + out_p) * 4        # hs (f32 MXU result)
                     + hid_p * csize              # h cast for second matmul
                     + out_p * 4                  # y (f32)
                     + in_p * csize)              # x value materialized in VMEM
    if weight_bytes + 8 * per_row_bytes > vmem_plan_budget:
        # TODO(synk): add a lane-aligned column-tiling grid axis over [W1|W3]
        # and W2 ("arbitrary" semantics) for layer widths whose fully-resident
        # weights overflow the per-core VMEM budget.
        raise ValueError(
            f"ResidualBlock weights ({weight_bytes} B) + minimal tiles exceed the "
            f"VMEM plan budget ({vmem_plan_budget} B); widths too large for the "
            "fully-resident-weight kernel.")
    vmem_max_bm = max(8, (vmem_plan_budget - weight_bytes) // per_row_bytes // 8 * 8)

    # ---- batch tile sizing ---------------------------------------------------
    # Target ~4 MiB of x+out payload per grid step so the ~600-cycle per-step
    # overhead is negligible; cap by VMEM and an absolute 4096 rows.
    payload_per_row = in_p * csize + out_p * osize
    target_bm = _round_up(pl.cdiv(4 * 1024 * 1024, payload_per_row), 8)
    bm_cap = max(8, min(target_bm, vmem_max_bm, 4096))
    if block_m is not None:
        bm_cap = max(8, min(bm_cap, _round_up(block_m, 8)))

    grid_count = pl.cdiv(n, bm_cap)
    if n > 8:
        grid_count = max(grid_count, 2)          # keep both v7x TCs busy
    if grid_count > 1 and grid_count % 2 == 1:
        grid_count += 1                          # even split across 2 TCs
    bm = _round_up(pl.cdiv(n, grid_count), 8)    # balanced tiles, minimal padding
    grid_count = pl.cdiv(n, bm)
    if grid_count > 1 and grid_count % 2 == 1:
        grid_count += 1
    n_p = bm * grid_count

    # ---- operand preparation -------------------------------------------------
    def pad2(a, rows, cols):
        if a.shape == (rows, cols):
            return a
        return jnp.pad(a, ((0, rows - a.shape[0]), (0, cols - a.shape[1])))

    # x: skip the pad/cast entirely when it is a no-op; otherwise one fused pass.
    need_cast = x.dtype != compute_dtype
    need_pad = (n_p != n) or (in_p != input_dim)
    if need_cast and need_pad:
        x_pad = jnp.pad(x.astype(compute_dtype),
                        ((0, n_p - n), (0, in_p - input_dim)))
    elif need_pad:
        x_pad = jnp.pad(x, ((0, n_p - n), (0, in_p - input_dim)))
    elif need_cast:
        x_pad = x.astype(compute_dtype)
    else:
        x_pad = x

    # Fuse the main-path and skip-path first matmuls into one RHS: [W1 | W3].
    w13 = jnp.concatenate([pad2(w1, in_p, hid_p), pad2(w3, in_p, out_p)],
                          axis=1).astype(compute_dtype)
    b13 = jnp.concatenate([pad2(b1, 1, hid_p), pad2(b3, 1, out_p)],
                          axis=1).astype(jnp.float32)
    w2_pad = pad2(w2, hid_p, out_p).astype(compute_dtype)
    b2_pad = pad2(b2, 1, out_p).astype(jnp.float32)

    grid = (grid_count,)

    cost = pl.CostEstimate(
        flops=2 * n_p * (in_p * (hid_p + out_p) + hid_p * out_p),
        transcendentals=0,
        bytes_accessed=(n_p * in_p * csize                      # x
                        + in_p * (hid_p + out_p) * csize        # [W1 | W3]
                        + hid_p * out_p * csize                 # W2
                        + (hid_p + 2 * out_p) * 4               # biases
                        + n_p * out_p * osize),                 # out
    )

    if vmem_limit_bytes is None:
        need = weight_bytes + bm * per_row_bytes + (2 << 20)    # Mosaic headroom
        vmem_limit_bytes = min(max(need, 8 << 20), 48 << 20)

    def build(single_buffer_weights):
        def const(r, c):
            # Constant index_map -> block never changes; one buffer suffices
            # (halves weight-resident VMEM vs the default double buffering).
            if single_buffer_weights:
                return pl.BlockSpec((r, c), lambda i: (0, 0),
                                    pipeline_mode=pl.Buffered(1))
            return pl.BlockSpec((r, c), lambda i: (0, 0))

        if _HAS_BUFFERED and x_buffers != 2:
            x_spec = pl.BlockSpec((bm, in_p), lambda i: (i, 0),
                                  pipeline_mode=pl.Buffered(x_buffers))
        else:
            x_spec = pl.BlockSpec((bm, in_p), lambda i: (i, 0))

        return pl.pallas_call(
            residual_block_kernel,
            out_shape=jax.ShapeDtypeStruct((n_p, out_p), out_dtype),
            grid_spec=pltpu.PrefetchScalarGridSpec(
                num_scalar_prefetch=0,
                grid=grid,
                in_specs=[
                    x_spec,                                       # x tile (streaming)
                    const(in_p, hid_p + out_p),                   # [W1 | W3]
                    const(1, hid_p + out_p),                      # [b1 | b3]
                    const(hid_p, out_p),                          # W2
                    const(1, out_p),                              # b2
                ],
                out_specs=pl.BlockSpec((bm, out_p), lambda i: (i, 0)),
            ),
            compiler_params=pltpu.CompilerParams(
                dimension_semantics=("parallel",),   # shards over v7x's 2 TCs
                vmem_limit_bytes=vmem_limit_bytes,
            ),
            cost_estimate=cost,
        )

    args = (x_pad, w13, b13, w2_pad, b2_pad)
    if _HAS_BUFFERED:
        try:
            out = build(single_buffer_weights=True)(*args)
        except _BUFFERED_FALLBACK_ERRORS:
            # This jax build rejects pipeline_mode=pl.Buffered(1); identical
            # semantics with default double-buffered weight blocks.
            out = build(single_buffer_weights=False)(*args)
    else:
        out = build(single_buffer_weights=False)(*args)

    return out[:n, :output_dim]


def init_linear_params(key, in_dim, out_dim, dtype=jnp.float32):
    """Deterministic nn.Linear-style init: U(-1/sqrt(in), 1/sqrt(in))."""
    kw, kb = jax.random.split(key)
    bound = 1.0 / (in_dim ** 0.5)
    # Stored already transposed to (in_dim, out_dim) for the kernel.
    w = jax.random.uniform(kw, (in_dim, out_dim), dtype, minval=-bound, maxval=bound)
    b = jax.random.uniform(kb, (1, out_dim), dtype, minval=-bound, maxval=bound)
    return w, b


if __name__ == "__main__":

    def run_case(key, batch, input_dim, hidden_dim, output_dim,
                 compute_dtype, atol, rtol):
        kx, k1, k2, k3 = jax.random.split(key, 4)
        x = jax.random.normal(kx, (batch, input_dim), jnp.float32)
        w1, b1 = init_linear_params(k1, input_dim, hidden_dim)
        w2, b2 = init_linear_params(k2, hidden_dim, output_dim)
        w3, b3 = init_linear_params(k3, input_dim, output_dim)

        out = jax.block_until_ready(
            residual_block(x, w1, b1, w2, b2, w3, b3,
                           compute_dtype=compute_dtype))

        # Pure-JAX reference of the forward-pass semantics.
        ref = jnp.maximum(x @ w1 + b1, 0.0) @ w2 + b2 + (x @ w3 + b3)
        assert out.shape == (batch, output_dim)
        assert jnp.allclose(out, ref, atol=atol, rtol=rtol), \
            float(jnp.max(jnp.abs(out - ref)))

    key = jax.random.PRNGKey(0)
    k_a, k_b, k_c = jax.random.split(key, 3)
    # Shapes implied by the module: (batch, input_dim) feature vectors.
    # f32 MXU operands -> reference-exact tolerance.
    run_case(k_a, batch=16, input_dim=16, hidden_dim=32, output_dim=16,
             compute_dtype=jnp.float32, atol=2e-5, rtol=2e-5)
    # Non-aligned shapes exercise the lane/sublane zero-padding path.
    run_case(k_b, batch=10, input_dim=20, hidden_dim=48, output_dim=24,
             compute_dtype=jnp.float32, atol=2e-5, rtol=2e-5)
    # Default path: bf16 MXU operands, f32 accumulation/epilogue -> relaxed
    # tolerance bounded by input/weight rounding only.
    run_case(k_c, batch=64, input_dim=16, hidden_dim=32, output_dim=16,
             compute_dtype=jnp.bfloat16, atol=3e-2, rtol=3e-2)

    # TODO(synk): spectral_norm=True (power-iteration weight reparameterization)
    # is a parameterization-time transform, not part of the forward hot path.
    print("KERNEL_OK")
</pallas_src>

<mosaic_0001>
module attributes {stable_mosaic.version = 11 : i64} {
  func.func @residual_block_kernel(%arg0: i32, %arg1: memref<8x128xf32, #tpu.memory_space<vmem>>, %arg2: memref<128x256xf32, #tpu.memory_space<vmem>>, %arg3: memref<1x256xf32, #tpu.memory_space<vmem>>, %arg4: memref<128x128xf32, #tpu.memory_space<vmem>>, %arg5: memref<1x128xf32, #tpu.memory_space<vmem>>, %arg6: memref<8x128xf32, #tpu.memory_space<vmem>>) attributes {dimension_semantics = [#tpu.dimension_semantics<parallel>], iteration_bounds = array<i64: 2>, scalar_prefetch = 0 : i64, scratch_operands = 0 : i64, tpu.core_type = #tpu.core_type<tc>, window_params = [{transform_indices = @transform_0, window_bounds = array<i64: 8, 128>}, {pipeline_mode = #tpu.pipeline_mode<synchronous>, transform_indices = @transform_1, window_bounds = array<i64: 128, 256>}, {pipeline_mode = #tpu.pipeline_mode<synchronous>, transform_indices = @transform_2, window_bounds = array<i64: 1, 256>}, {pipeline_mode = #tpu.pipeline_mode<synchronous>, transform_indices = @transform_3, window_bounds = array<i64: 128, 128>}, {pipeline_mode = #tpu.pipeline_mode<synchronous>, transform_indices = @transform_4, window_bounds = array<i64: 1, 128>}, {transform_indices = @transform_5, window_bounds = array<i64: 8, 128>}]} {
    %c0 = arith.constant 0 : index
    %c0_0 = arith.constant 0 : index
    %0 = vector.load %arg1[%c0, %c0_0] : memref<8x128xf32, #tpu.memory_space<vmem>>, vector<8x128xf32>
    %c0_1 = arith.constant 0 : index
    %c0_2 = arith.constant 0 : index
    %1 = vector.load %arg2[%c0_1, %c0_2] : memref<128x256xf32, #tpu.memory_space<vmem>>, vector<128x256xf32>
    %cst = arith.constant dense<0.000000e+00> : vector<8x256xf32>
    %2 = tpu.matmul %0, %1, %cst {dimension_numbers = #tpu.dot_dimension_numbers<[1], [0], [0], [1], [0, 0, 1, 1], [], []>} : vector<8x128xf32>, vector<128x256xf32>, vector<8x256xf32> -> vector<8x256xf32>
    %c0_3 = arith.constant 0 : index
    %c0_4 = arith.constant 0 : index
    %3 = vector.load %arg3[%c0_3, %c0_4] : memref<1x256xf32, #tpu.memory_space<vmem>>, vector<1x256xf32>
    %4 = vector.broadcast %3 : vector<1x256xf32> to vector<8x256xf32>
    %5 = arith.addf %2, %4 : vector<8x256xf32>
    %6 = vector.extract_strided_slice %5 {offsets = [0, 0], sizes = [8, 128], strides = [1, 1]} : vector<8x256xf32> to vector<8x128xf32>
    %cst_5 = arith.constant 0.000000e+00 : f32
    %7 = vector.broadcast %cst_5 : f32 to vector<8x128xf32>
    %8 = arith.maximumf %6, %7 : vector<8x128xf32>
    %9 = vector.extract_strided_slice %5 {offsets = [0, 128], sizes = [8, 128], strides = [1, 1]} : vector<8x256xf32> to vector<8x128xf32>
    %c0_6 = arith.constant 0 : index
    %c0_7 = arith.constant 0 : index
    %10 = vector.load %arg4[%c0_6, %c0_7] : memref<128x128xf32, #tpu.memory_space<vmem>>, vector<128x128xf32>
    %cst_8 = arith.constant dense<0.000000e+00> : vector<8x128xf32>
    %11 = tpu.matmul %8, %10, %cst_8 {dimension_numbers = #tpu.dot_dimension_numbers<[1], [0], [0], [1], [0, 0, 1, 1], [], []>} : vector<8x128xf32>, vector<128x128xf32>, vector<8x128xf32> -> vector<8x128xf32>
    %c0_9 = arith.constant 0 : index
    %c0_10 = arith.constant 0 : index
    %12 = vector.load %arg5[%c0_9, %c0_10] : memref<1x128xf32, #tpu.memory_space<vmem>>, vector<1x128xf32>
    %13 = vector.broadcast %12 : vector<1x128xf32> to vector<8x128xf32>
    %14 = arith.addf %11, %13 : vector<8x128xf32>
    %15 = arith.addf %14, %9 : vector<8x128xf32>
    %c0_11 = arith.constant 0 : index
    %c0_12 = arith.constant 0 : index
    %16 = vector.load %arg6[%c0_11, %c0_12] : memref<8x128xf32, #tpu.memory_space<vmem>>, vector<8x128xf32>
    tpu.vector_store %arg6[%c0_11, %c0_12], %15 {strides = array<i32>} : memref<8x128xf32, #tpu.memory_space<vmem>>, vector<8x128xf32>,
    return
  }
  func.func @transform_0(%arg0: i32) -> (i32, i32) {
    %c0_i32 = arith.constant 0 : i32
    %c0_i32_0 = arith.constant 0 : i32
    return %arg0, %c0_i32 : i32, i32
  }
  func.func @transform_1(%arg0: i32) -> (i32, i32) {
    %c0_i32 = arith.constant 0 : i32
    %c0_i32_0 = arith.constant 0 : i32
    %c0_i32_1 = arith.constant 0 : i32
    return %c0_i32, %c0_i32_0 : i32, i32
  }
  func.func @transform_2(%arg0: i32) -> (i32, i32) {
    %c0_i32 = arith.constant 0 : i32
    %c0_i32_0 = arith.constant 0 : i32
    %c0_i32_1 = arith.constant 0 : i32
    return %c0_i32, %c0_i32_0 : i32, i32
  }
  func.func @transform_3(%arg0: i32) -> (i32, i32) {
    %c0_i32 = arith.constant 0 : i32
    %c0_i32_0 = arith.constant 0 : i32
    %c0_i32_1 = arith.constant 0 : i32
    return %c0_i32, %c0_i32_0 : i32, i32
  }
  func.func @transform_4(%arg0: i32) -> (i32, i32) {
    %c0_i32 = arith.constant 0 : i32
    %c0_i32_0 = arith.constant 0 : i32
    %c0_i32_1 = arith.constant 0 : i32
    return %c0_i32, %c0_i32_0 : i32, i32
  }
  func.func @transform_5(%arg0: i32) -> (i32, i32) {
    %c0_i32 = arith.constant 0 : i32
    %c0_i32_0 = arith.constant 0 : i32
    return %arg0, %c0_i32 : i32, i32
  }
}

</mosaic_0001>

<llo_original>
// kernel: tpu_custom_call.1
$region0: #{tpu_custom_call.1}
  #allocation0 [shape = 'u32[]', space=smem, size = 0x4, offset = 0x4, fixed_abs, tag = 'smem constant byte address 0x4 - core index']
  #allocation1 [shape = 'u32[144,128]{1,0:T(1,128)}', space=vmem, size = 0x12000, scoped, tag = 'internal scratch']
  %s0 = inlined_call_operand.hbm [shape: f32[16,128], index: 0, kind: input, shape index: {}]
  %s1 = inlined_call_operand.hbm [shape: f32[128,256], index: 1, kind: input, shape index: {}]
  %s2 = inlined_call_operand.vmem [shape: f32[1,256], index: 2, kind: input, shape index: {}]
  %s3 = inlined_call_operand.hbm [shape: f32[128,128], index: 3, kind: input, shape index: {}]
  %s4 = inlined_call_operand.vmem [shape: f32[1,128], index: 4, kind: input, shape index: {}]
  %s5 = inlined_call_operand.hbm [shape: f32[16,128], index: 5, kind: output, shape index: {}]
  %s6 = sld [smem:[#allocation0]]
  $region65: #{tpu_custom_call.1} parent=0
    _
  %s8 = ssub.s32 1, %s6
  %s9 = scalar_select 0, %s8, %s6
  $region1: #{tpu_custom_call.1} parent=0
    #allocation2 [shape = 'u8[8192]{0}', space=vmem, size = 0x2000, scoped, tag = 'input window, operand 0']
    #allocation3 [shape = 's32[2]{0}', space=sflag, size = 0x8, scoped, tag = 'scoped memory for tpu_custom_call.1']
    #allocation4 [shape = 's32[2]{0}', space=sflag, size = 0x8, scoped, tag = 'scoped memory for tpu_custom_call.1']
    #allocation5 [shape = 'u8[131072]{0}', space=vmem, size = 0x20000, scoped, tag = 'input window, operand 1, single buffered']
    #allocation6 [shape = 's32[1]{0}', space=sflag, size = 0x4, scoped, tag = 'scoped memory for tpu_custom_call.1']
    #allocation7 [shape = 'u8[65536]{0}', space=vmem, size = 0x10000, scoped, tag = 'input window, operand 3, single buffered']
    #allocation8 [shape = 'u8[8192]{0}', space=vmem, size = 0x2000, scoped, tag = 'output window, operand 0']
    %10 = vsyncpa [#allocation3], 0
    %s11 = scalar_lea.sflag [#allocation3], 1
    %12 = vsyncpa %s11, 0
    %13 = vsyncpa [#allocation6], 0
    %14 = vsyncpa [#allocation4], 0
    %s15 = scalar_lea.sflag [#allocation4], 1
    %16 = vsyncpa %s15, 0
    loop: start=0, step=1, limit=4
    $region2: #{tpu_custom_call.1} parent=1 // loop_pre_header
      _
    $region3: #{tpu_custom_call.1} parent=1 // loop_header
      %s18 = sphi 0, %s22
      %p19 = scmp.ge.s32.totalorder %s18, 4
      %s28 = sphi 0, %s30
      %s31 = sphi 0, %s28
      %s32 = sphi 0, %s31
      %s48 = sphi 0, %s32
      %s52 = sphi 0, %s52
      %s54 = sphi 0, %s52
      %s55 = sphi 0, %s54
      %s69 = sphi 0, %s55
      %s73 = sphi 0, %s73
      %s75 = sphi 0, %s73
      %s76 = sphi 0, %s75
      %s90 = sphi 0, %s76
      %s94 = sphi 0, %s94
      %s96 = sphi 0, %s94
      %s97 = sphi 0, %s96
      %s111 = sphi 0, %s97
      %s115 = sphi 0, %s115
      %s117 = sphi 0, %s115
      %s118 = sphi 0, %s117
      %s132 = sphi 0, %s118
      %s138 = sphi 0, %s140
      %s141 = sphi 0, %s138
      %s142 = sphi 0, %s141
      %s158 = sphi 0, %s142
    $region4: #{tpu_custom_call.1} parent=1 // loop_header_branch
      %21 = sbr.rel (%p19) target = $region8
    $region5: #{tpu_custom_call.1} parent=1 // loop_body
      %s23 = ssub.s32 %s18, 1
      %s24 = ssub.s32 %s18, 2
      %s25 = sadd.s32 %s18, 1
      %s26 = ssub.s32 %s18, %s25
      %p27 = scmp.eq.s32.totalorder %s26, 0
      %s29 = sadd.s32 %s28, 1
      %s30 = scalar_select %p27, %s28, %s29
      %p33 = pneg %p27
      %p34 = scmp.eq.s32.totalorder %s18, 1
      %p35 = por %p33, %p34
      %p36 = scmp.ne.s32.totalorder %s28, %s31
      %p37 = scmp.eq.s32.totalorder %s18, 0
      %p38 = por %p36, %p37
      %p39 = scmp.ne.s32.totalorder %s28, %s31
      %p40 = scmp.eq.s32.totalorder %s23, 1
      %p41 = por %p39, %p40
      %p42 = scmp.ne.s32.totalorder %s31, %s32
      %p43 = scmp.eq.s32.totalorder %s23, 0
      %p44 = por %p42, %p43
      %p45 = scmp.ne.s32.totalorder %s31, %s32
      %p46 = scmp.eq.s32.totalorder %s24, 1
      %p47 = por %p45, %p46
      %p49 = scmp.ne.s32.totalorder %s32, %s48
      %p50 = scmp.eq.s32.totalorder %s24, 0
      %p51 = por %p49, %p50
      %s53 = sadd.s32 %s52, 1
      %p56 = scmp.eq.s32.totalorder %s18, 1
      %p57 = scmp.ne.s32.totalorder %s52, %s54
      %p58 = scmp.eq.s32.totalorder %s18, 0
      %p59 = por %p57, %p58
      %p60 = scmp.ne.s32.totalorder %s52, %s54
      %p61 = scmp.eq.s32.totalorder %s23, 1
      %p62 = por %p60, %p61
      %p63 = scmp.ne.s32.totalorder %s54, %s55
      %p64 = scmp.eq.s32.totalorder %s23, 0
      %p65 = por %p63, %p64
      %p66 = scmp.ne.s32.totalorder %s54, %s55
      %p67 = scmp.eq.s32.totalorder %s24, 1
      %p68 = por %p66, %p67
      %p70 = scmp.ne.s32.totalorder %s55, %s69
      %p71 = scmp.eq.s32.totalorder %s24, 0
      %p72 = por %p70, %p71
      %s74 = sadd.s32 %s73, 1
      %p77 = scmp.eq.s32.totalorder %s18, 1
      %p78 = scmp.ne.s32.totalorder %s73, %s75
      %p79 = scmp.eq.s32.totalorder %s18, 0
      %p80 = por %p78, %p79
      %p81 = scmp.ne.s32.totalorder %s73, %s75
      %p82 = scmp.eq.s32.totalorder %s23, 1
      %p83 = por %p81, %p82
      %p84 = scmp.ne.s32.totalorder %s75, %s76
      %p85 = scmp.eq.s32.totalorder %s23, 0
      %p86 = por %p84, %p85
      %p87 = scmp.ne.s32.totalorder %s75, %s76
      %p88 = scmp.eq.s32.totalorder %s24, 1
      %p89 = por %p87, %p88
      %p91 = scmp.ne.s32.totalorder %s76, %s90
      %p92 = scmp.eq.s32.totalorder %s24, 0
      %p93 = por %p91, %p92
      %s95 = sadd.s32 %s94, 1
      %p98 = scmp.eq.s32.totalorder %s18, 1
      %p99 = scmp.ne.s32.totalorder %s94, %s96
      %p100 = scmp.eq.s32.totalorder %s18, 0
      %p101 = por %p99, %p100
      %p102 = scmp.ne.s32.totalorder %s94, %s96
      %p103 = scmp.eq.s32.totalorder %s23, 1
      %p104 = por %p102, %p103
      %p105 = scmp.ne.s32.totalorder %s96, %s97
      %p106 = scmp.eq.s32.totalorder %s23, 0
      %p107 = por %p105, %p106
      %p108 = scmp.ne.s32.totalorder %s96, %s97
      %p109 = scmp.eq.s32.totalorder %s24, 1
      %p110 = por %p108, %p109
      %p112 = scmp.ne.s32.totalorder %s97, %s111
      %p113 = scmp.eq.s32.totalorder %s24, 0
      %p114 = por %p112, %p113
      %s116 = sadd.s32 %s115, 1
      %p119 = scmp.eq.s32.totalorder %s18, 1
      %p120 = scmp.ne.s32.totalorder %s115, %s117
      %p121 = scmp.eq.s32.totalorder %s18, 0
      %p122 = por %p120, %p121
      %p123 = scmp.ne.s32.totalorder %s115, %s117
      %p124 = scmp.eq.s32.totalorder %s23, 1
      %p125 = por %p123, %p124
      %p126 = scmp.ne.s32.totalorder %s117, %s118
      %p127 = scmp.eq.s32.totalorder %s23, 0
      %p128 = por %p126, %p127
      %p129 = scmp.ne.s32.totalorder %s117, %s118
      %p130 = scmp.eq.s32.totalorder %s24, 1
      %p131 = por %p129, %p130
      %p133 = scmp.ne.s32.totalorder %s118, %s132
      %p134 = scmp.eq.s32.totalorder %s24, 0
      %p135 = por %p133, %p134
      %s136 = ssub.s32 %s18, %s25
      %p137 = scmp.eq.s32.totalorder %s136, 0
      %s139 = sadd.s32 %s138, 1
      %s140 = scalar_select %p137, %s138, %s139
      %p143 = pneg %p137
      %p144 = scmp.eq.s32.totalorder %s18, 1
      %p145 = por %p143, %p144
      %p146 = scmp.ne.s32.totalorder %s138, %s141
      %p147 = scmp.eq.s32.totalorder %s18, 0
      %p148 = por %p146, %p147
      %p149 = scmp.ne.s32.totalorder %s138, %s141
      %p150 = scmp.eq.s32.totalorder %s23, 1
      %p151 = por %p149, %p150
      %p152 = scmp.ne.s32.totalorder %s141, %s142
      %p153 = scmp.eq.s32.totalorder %s23, 0
      %p154 = por %p152, %p153
      %p155 = scmp.ne.s32.totalorder %s141, %s142
      %p156 = scmp.eq.s32.totalorder %s24, 1
      %p157 = por %p155, %p156
      %p159 = scmp.ne.s32.totalorder %s142, %s158
      %p160 = scmp.eq.s32.totalorder %s24, 0
      %p161 = por %p159, %p160
      %p162 = scmp.le.s32.totalorder 1, %s18
      %p163 = scmp.lt.s32.totalorder %s18, 3
      %p164 = pnand %p162, %p163
      %p165 = pneg %p164
      // Predicated region
      $region9: #{tpu_custom_call.1} parent=5 // pred_check
        _
      $region10: #{tpu_custom_call.1} parent=5 // pred_check_branch
        %167 = sbr.rel (%p164) target = $region12
      $region11: #{tpu_custom_call.1} parent=5 // pred_region
        %s168 = ssub.s32 %s18, 1
        // Predicated region
        $region13: #{tpu_custom_call.1} parent=11 // pred_check
          %p169 = pneg %p65
        $region14: #{tpu_custom_call.1} parent=11 // pred_check_branch
          %171 = sbr.rel (%p169) target = $region16
        $region15: #{tpu_custom_call.1} parent=11 // pred_region
          %s173 = ssub.s32 4096, 4096
          %174 = vsyncadd [#allocation6], %s173
          %s175 = sshll.u32 [#allocation5], 4
          %s176 = int_to_ptr.vmem [resolvable:$true] %s175
          %181 = dma.hbm_to_vmem [thread:$0]  %s1, 4096, %s176, [#allocation6], 256, 256, 16
        $region16: #{tpu_custom_call.1} parent=11 // pred_fallthru
          _
        // Predicated region
        $region17: #{tpu_custom_call.1} parent=11 // pred_check
          %p182 = pneg %p86
        $region18: #{tpu_custom_call.1} parent=11 // pred_check_branch
          %184 = sbr.rel (%p182) target = $region20
        $region19: #{tpu_custom_call.1} parent=11 // pred_region
          _
        $region20: #{tpu_custom_call.1} parent=11 // pred_fallthru
          _
        // Predicated region
        $region21: #{tpu_custom_call.1} parent=11 // pred_check
          %p185 = pneg %p107
        $region22: #{tpu_custom_call.1} parent=11 // pred_check_branch
          %187 = sbr.rel (%p185) target = $region24
        $region23: #{tpu_custom_call.1} parent=11 // pred_region
          %s189 = ssub.s32 2048, 2048
          %190 = vsyncadd [#allocation6], %s189
          %s191 = sshll.u32 [#allocation7], 4
          %s192 = int_to_ptr.vmem [resolvable:$true] %s191
          %197 = dma.hbm_to_vmem [thread:$0]  %s3, 2048, %s192, [#allocation6], 128, 128, 8
        $region24: #{tpu_custom_call.1} parent=11 // pred_fallthru
          _
        // Predicated region
        $region25: #{tpu_custom_call.1} parent=11 // pred_check
          %p198 = pneg %p128
        $region26: #{tpu_custom_call.1} parent=11 // pred_check_branch
          %200 = sbr.rel (%p198) target = $region28
        $region27: #{tpu_custom_call.1} parent=11 // pred_region
          _
        $region28: #{tpu_custom_call.1} parent=11 // pred_fallthru
          _
      $region12: #{tpu_custom_call.1} parent=5 // pred_fallthru
        _
      %p201 = scmp.lt.s32.totalorder %s18, 2
      // Predicated region
      $region29: #{tpu_custom_call.1} parent=5 // pred_check
        %p202 = pneg %p201
      $region30: #{tpu_custom_call.1} parent=5 // pred_check_branch
        %204 = sbr.rel (%p202) target = $region32
      $region31: #{tpu_custom_call.1} parent=5 // pred_region
        // Predicated region
        $region33: #{tpu_custom_call.1} parent=31 // pred_check
          %p205 = pneg %p38
        $region34: #{tpu_custom_call.1} parent=31 // pred_check_branch
          %207 = sbr.rel (%p205) target = $region36
        $region35: #{tpu_custom_call.1} parent=31 // pred_region
          %s208 = sand.u32 %s28, 1
          %s209 = scalar_lea.sflag [#allocation3], %s208
          %s210 = sand.u32 %s28, 1
          %s211 = smul.addr %s210, 8
          %s212 = scalar_lea.vmem [#allocation2], %s211
          %s214 = ssub.s32 128, 128
          %215 = vsyncadd %s209, %s214
          %s216 = smul.addr %s18, 128
          %s217 = scalar_lea.hbm %s0, %s216
          %s219 = sshll.u32 %s212, 4
          %s220 = int_to_ptr.vmem [resolvable:$true] %s219
          %222 = dma.hbm_to_vmem [thread:$0]  %s217, 128, %s220, %s209
        $region36: #{tpu_custom_call.1} parent=31 // pred_fallthru
          _
      $region32: #{tpu_custom_call.1} parent=5 // pred_fallthru
        _
      %p223 = scmp.le.s32.totalorder 1, %s18
      %p224 = scmp.lt.s32.totalorder %s18, 3
      %p225 = pnand %p223, %p224
      %p226 = pneg %p225
      // Predicated region
      $region37: #{tpu_custom_call.1} parent=5 // pred_check
        _
      $region38: #{tpu_custom_call.1} parent=5 // pred_check_branch
        %228 = sbr.rel (%p225) target = $region40
      $region39: #{tpu_custom_call.1} parent=5 // pred_region
        %s229 = ssub.s32 %s18, 1
        %s230 = sand.u32 %s31, 1
        %s231 = scalar_lea.sflag [#allocation3], %s230
        %s232 = sand.u32 %s31, 1
        %s233 = smul.addr %s232, 8
        %s234 = scalar_lea.vmem [#allocation2], %s233
        // Predicated region
        $region41: #{tpu_custom_call.1} parent=39 // pred_check
          %p235 = pneg %p44
        $region42: #{tpu_custom_call.1} parent=39 // pred_check_branch
          %237 = sbr.rel (%p235) target = $region44
        $region43: #{tpu_custom_call.1} parent=39 // pred_region
          %238 = dma.done %s231, 128
        $region44: #{tpu_custom_call.1} parent=39 // pred_fallthru
          _
        // Predicated region
        $region45: #{tpu_custom_call.1} parent=39 // pred_check
          %p239 = pneg %p65
        $region46: #{tpu_custom_call.1} parent=39 // pred_check_branch
          %241 = sbr.rel (%p239) target = $region48
        $region47: #{tpu_custom_call.1} parent=39 // pred_region
          %242 = dma.done [#allocation6], 4096
        $region48: #{tpu_custom_call.1} parent=39 // pred_fallthru
          _
        // Predicated region
        $region49: #{tpu_custom_call.1} parent=39 // pred_check
          %p243 = pneg %p107
        $region50: #{tpu_custom_call.1} parent=39 // pred_check_branch
          %245 = sbr.rel (%p243) target = $region52
        $region51: #{tpu_custom_call.1} parent=39 // pred_region
          %246 = dma.done [#allocation6], 2048
        $region52: #{tpu_custom_call.1} parent=39 // pred_fallthru
          _
        %s247 = sand.u32 %s31, 1
        %s248 = scalar_lea.sflag [#allocation3], %s247
        %s249 = sand.u32 %s31, 1
        %s250 = smul.addr %s249, 8
        %s251 = scalar_lea.vmem [#allocation2], %s250
        %p252 = pneg %p44
        %p253 = pneg %p41
        %p254 = pneg %p65
        %p255 = pneg %p62
        %p256 = pneg %p86
        %p257 = pneg %p83
        %p258 = pneg %p107
        %p259 = pneg %p104
        %p260 = pneg %p128
        %p261 = pneg %p125
        %p262 = pneg %p154
        %p263 = pneg %p151
        %s264 = sand.u32 %s141, 1
        %s265 = scalar_lea.sflag [#allocation4], %s264
        %s266 = sand.u32 %s141, 1
        %s267 = smul.addr %s266, 8
        %s268 = scalar_lea.vmem [#allocation8], %s267
        %v269 = vld [vmem:[%s234] sm:$0xff]
        %v270 = vld [vmem:[#allocation5] sm:$0xff]
        %v271 = vld [vmem:[#allocation5 + $0x8] sm:$0xff]
        %v272 = vld [vmem:[#allocation5 + $0x10] sm:$0xff]
        %v273 = vld [vmem:[#allocation5 + $0x18] sm:$0xff]
        %v274 = vld [vmem:[#allocation5 + $0x20] sm:$0xff]
        %v275 = vld [vmem:[#allocation5 + $0x28] sm:$0xff]
        %v276 = vld [vmem:[#allocation5 + $0x30] sm:$0xff]
        %v277 = vld [vmem:[#allocation5 + $0x38] sm:$0xff]
        %v278 = vld [vmem:[#allocation5 + $0x40] sm:$0xff]
        %v279 = vld [vmem:[#allocation5 + $0x48] sm:$0xff]
        %v280 = vld [vmem:[#allocation5 + $0x50] sm:$0xff]
        %v281 = vld [vmem:[#allocation5 + $0x58] sm:$0xff]
        %v282 = vld [vmem:[#allocation5 + $0x60] sm:$0xff]
        %v283 = vld [vmem:[#allocation5 + $0x68] sm:$0xff]
        %v284 = vld [vmem:[#allocation5 + $0x70] sm:$0xff]
        %v285 = vld [vmem:[#allocation5 + $0x78] sm:$0xff]
        %v286 = vld [vmem:[#allocation5 + $0x80] sm:$0xff]
        %v287 = vld [vmem:[#allocation5 + $0x88] sm:$0xff]
        %v288 = vld [vmem:[#allocation5 + $0x90] sm:$0xff]
        %v289 = vld [vmem:[#allocation5 + $0x98] sm:$0xff]
        %v290 = vld [vmem:[#allocation5 + $0xa0] sm:$0xff]
        %v291 = vld [vmem:[#allocation5 + $0xa8] sm:$0xff]
        %v292 = vld [vmem:[#allocation5 + $0xb0] sm:$0xff]
        %v293 = vld [vmem:[#allocation5 + $0xb8] sm:$0xff]
        %v294 = vld [vmem:[#allocation5 + $0xc0] sm:$0xff]
        %v295 = vld [vmem:[#allocation5 + $0xc8] sm:$0xff]
        %v296 = vld [vmem:[#allocation5 + $0xd0] sm:$0xff]
        %v297 = vld [vmem:[#allocation5 + $0xd8] sm:$0xff]
        %v298 = vld [vmem:[#allocation5 + $0xe0] sm:$0xff]
        %v299 = vld [vmem:[#allocation5 + $0xe8] sm:$0xff]
        %v300 = vld [vmem:[#allocation5 + $0xf0] sm:$0xff]
        %v301 = vld [vmem:[#allocation5 + $0xf8] sm:$0xff]
        %v302 = vld [vmem:[%s2] sm:$0x3]
        %v304 = vlaneseq
        %v305 = vshrl.u32 %v304, 7
        %v306 = vsub.s32 0, %v305
        %v307 = vrot.slane %v302, %v306
        %v308 = vlaneseq
        %v309 = vshrl.u32 %v308, 7
        %v310 = vsub.s32 1, %v309
        %v311 = vrot.slane %v302, %v310
        %314 = vmatprep.subr.mxu0 %v271
        %315 = vmatpush1.msra.mxu0 %v270
        %316 = vmatprep.subr.mxu0 %v273
        %317 = vmatpush1.msra.mxu0 %v272
        %318 = vmatprep.subr.mxu0 %v275
        %319 = vmatpush1.msra.mxu0 %v274
        %320 = vmatprep.subr.mxu0 %v277
        %321 = vmatpush1.msra.mxu0 %v276
        %322 = vmatprep.subr.mxu0 %v279
        %323 = vmatpush1.msra.mxu0 %v278
        %324 = vmatprep.subr.mxu0 %v281
        %325 = vmatpush1.msra.mxu0 %v280
        %326 = vmatprep.subr.mxu0 %v283
        %327 = vmatpush1.msra.mxu0 %v282
        %328 = vmatprep.subr.mxu0 %v285
        %329 = vmatpush1.msra.mxu0 %v284
        %330 = vmatprep.subr.mxu0 %v287
        %331 = vmatpush1.msra.mxu0 %v286
        %332 = vmatprep.subr.mxu0 %v289
        %333 = vmatpush1.msra.mxu0 %v288
        %334 = vmatprep.subr.mxu0 %v291
        %335 = vmatpush1.msra.mxu0 %v290
        %336 = vmatprep.subr.mxu0 %v293
        %337 = vmatpush1.msra.mxu0 %v292
        %338 = vmatprep.subr.mxu0 %v295
        %339 = vmatpush1.msra.mxu0 %v294
        %340 = vmatprep.subr.mxu0 %v297
        %341 = vmatpush1.msra.mxu0 %v296
        %342 = vmatprep.subr.mxu0 %v299
        %343 = vmatpush1.msra.mxu0 %v298
        %344 = vmatprep.subr.mxu0 %v301
        %345 = vmatpush1.msra.mxu0 %v300
        %346 = vmatprep.subr.mxu0 0.0
        %347 = vmatpush1.msra.mxu0 0.0
        %348 = vmatprep.subr.mxu0 0.0
        %349 = vmatpush1.msra.mxu0 0.0
        %350 = vmatprep.subr.mxu0 0.0
        %351 = vmatpush1.msra.mxu0 0.0
        %352 = vmatprep.subr.mxu0 0.0
        %353 = vmatpush1.msra.mxu0 0.0
        %354 = vmatprep.subr.mxu0 0.0
        %355 = vmatpush1.msra.mxu0 0.0
        %356 = vmatprep.subr.mxu0 0.0
        %357 = vmatpush1.msra.mxu0 0.0
        %358 = vmatprep.subr.mxu0 0.0
        %359 = vmatpush1.msra.mxu0 0.0
        %360 = vmatprep.subr.mxu0 0.0
        %361 = vmatpush1.msra.mxu0 0.0
        %362 = vmatprep.subr.mxu0 0.0
        %363 = vmatpush1.msra.mxu0 0.0
        %364 = vmatprep.subr.mxu0 0.0
        %365 = vmatpush1.msra.mxu0 0.0
        %366 = vmatprep.subr.mxu0 0.0
        %367 = vmatpush1.msra.mxu0 0.0
        %368 = vmatprep.subr.mxu0 0.0
        %369 = vmatpush1.msra.mxu0 0.0
        %370 = vmatprep.subr.mxu0 0.0
        %371 = vmatpush1.msra.mxu0 0.0
        %372 = vmatprep.subr.mxu0 0.0
        %373 = vmatpush1.msra.mxu0 0.0
        %374 = vmatprep.subr.mxu0 0.0
        %375 = vmatpush1.msra.mxu0 0.0
        %376 = vmatprep.subr.mxu0 0.0
        %377 = vmatpush1.msra.mxu0 0.0
        %378 = vmatprep.mubr.f32.mxu0 0.0
        %379 = vmatmul.mubr.f32.gmra.mrb[0].mxu0 %v269
        %v380 = vpop.f32.mrb[0].mxu0
        %v381 = vadd.f32 %v307, %v380
        %v382 = vpop.f32.mrb[0].mxu0
        %v383 = vadd.f32 %v311, %v382
        %384 = vdwg.mxu0
        %v385 = vmax.f32 %v381, 0.0
        %v386 = vld [vmem:[#allocation7] sm:$0xff]
        %v387 = vld [vmem:[#allocation7 + $0x8] sm:$0xff]
        %v388 = vld [vmem:[#allocation7 + $0x10] sm:$0xff]
        %v389 = vld [vmem:[#allocation7 + $0x18] sm:$0xff]
        %v390 = vld [vmem:[#allocation7 + $0x20] sm:$0xff]
        %v391 = vld [vmem:[#allocation7 + $0x28] sm:$0xff]
        %v392 = vld [vmem:[#allocation7 + $0x30] sm:$0xff]
        %v393 = vld [vmem:[#allocation7 + $0x38] sm:$0xff]
        %v394 = vld [vmem:[#allocation7 + $0x40] sm:$0xff]
        %v395 = vld [vmem:[#allocation7 + $0x48] sm:$0xff]
        %v396 = vld [vmem:[#allocation7 + $0x50] sm:$0xff]
        %v397 = vld [vmem:[#allocation7 + $0x58] sm:$0xff]
        %v398 = vld [vmem:[#allocation7 + $0x60] sm:$0xff]
        %v399 = vld [vmem:[#allocation7 + $0x68] sm:$0xff]
        %v400 = vld [vmem:[#allocation7 + $0x70] sm:$0xff]
        %v401 = vld [vmem:[#allocation7 + $0x78] sm:$0xff]
        %v402 = vld [vmem:[%s4] sm:$0x1]
        %v404 = vlaneseq
        %v405 = vshrl.u32 %v404, 7
        %v406 = vsub.s32 0, %v405
        %v407 = vrot.slane %v402, %v406
        %409 = vmatprep.subr.mxu0 0.0
        %410 = vmatpush1.msra.mxu0 %v386
        %411 = vmatprep.subr.mxu0 0.0
        %412 = vmatpush1.msra.mxu0 %v387
        %413 = vmatprep.subr.mxu0 0.0
        %414 = vmatpush1.msra.mxu0 %v388
        %415 = vmatprep.subr.mxu0 0.0
        %416 = vmatpush1.msra.mxu0 %v389
        %417 = vmatprep.subr.mxu0 0.0
        %418 = vmatpush1.msra.mxu0 %v390
        %419 = vmatprep.subr.mxu0 0.0
        %420 = vmatpush1.msra.mxu0 %v391
        %421 = vmatprep.subr.mxu0 0.0
        %422 = vmatpush1.msra.mxu0 %v392
        %423 = vmatprep.subr.mxu0 0.0
        %424 = vmatpush1.msra.mxu0 %v393
        %425 = vmatprep.subr.mxu0 0.0
        %426 = vmatpush1.msra.mxu0 %v394
        %427 = vmatprep.subr.mxu0 0.0
        %428 = vmatpush1.msra.mxu0 %v395
        %429 = vmatprep.subr.mxu0 0.0
        %430 = vmatpush1.msra.mxu0 %v396
        %431 = vmatprep.subr.mxu0 0.0
        %432 = vmatpush1.msra.mxu0 %v397
        %433 = vmatprep.subr.mxu0 0.0
        %434 = vmatpush1.msra.mxu0 %v398
        %435 = vmatprep.subr.mxu0 0.0
        %436 = vmatpush1.msra.mxu0 %v399
        %437 = vmatprep.subr.mxu0 0.0
        %438 = vmatpush1.msra.mxu0 %v400
        %439 = vmatprep.subr.mxu0 0.0
        %440 = vmatpush1.msra.mxu0 %v401
        %441 = vmatprep.subr.mxu0 0.0
        %442 = vmatpush1.msra.mxu0 0.0
        %443 = vmatprep.subr.mxu0 0.0
        %444 = vmatpush1.msra.mxu0 0.0
        %445 = vmatprep.subr.mxu0 0.0
        %446 = vmatpush1.msra.mxu0 0.0
        %447 = vmatprep.subr.mxu0 0.0
        %448 = vmatpush1.msra.mxu0 0.0
        %449 = vmatprep.subr.mxu0 0.0
        %450 = vmatpush1.msra.mxu0 0.0
        %451 = vmatprep.subr.mxu0 0.0
        %452 = vmatpush1.msra.mxu0 0.0
        %453 = vmatprep.subr.mxu0 0.0
        %454 = vmatpush1.msra.mxu0 0.0
        %455 = vmatprep.subr.mxu0 0.0
        %456 = vmatpush1.msra.mxu0 0.0
        %457 = vmatprep.subr.mxu0 0.0
        %458 = vmatpush1.msra.mxu0 0.0
        %459 = vmatprep.subr.mxu0 0.0
        %460 = vmatpush1.msra.mxu0 0.0
        %461 = vmatprep.subr.mxu0 0.0
        %462 = vmatpush1.msra.mxu0 0.0
        %463 = vmatprep.subr.mxu0 0.0
        %464 = vmatpush1.msra.mxu0 0.0
        %465 = vmatprep.subr.mxu0 0.0
        %466 = vmatpush1.msra.mxu0 0.0
        %467 = vmatprep.subr.mxu0 0.0
        %468 = vmatpush1.msra.mxu0 0.0
        %469 = vmatprep.subr.mxu0 0.0
        %470 = vmatpush1.msra.mxu0 0.0
        %471 = vmatprep.subr.mxu0 0.0
        %472 = vmatpush1.msra.mxu0 0.0
        %473 = vmatprep.mubr.f32.mxu0 0.0
        %474 = vmatmul.mubr.f32.gmra.mrb[0].mxu0 %v385
        %v475 = vpop.f32.mrb[0].mxu0
        %v476 = vadd.f32 %v407, %v475
        %v477 = vpop.f32.mrb[0].mxu0
        %478 = vdwg.mxu0
        %v479 = vadd.f32 %v476, %v383
        %480 = vst [vmem:[%s268] sm:$0xff] %v479
        %s481 = sand.u32 %s141, 1
        %s482 = scalar_lea.sflag [#allocation4], %s481
        %s483 = sand.u32 %s141, 1
        %s484 = smul.addr %s483, 8
        %s485 = scalar_lea.vmem [#allocation8], %s484
        // Predicated region
        $region53: #{tpu_custom_call.1} parent=39 // pred_check
          %p486 = pneg %p151
        $region54: #{tpu_custom_call.1} parent=39 // pred_check_branch
          %488 = sbr.rel (%p486) target = $region56
        $region55: #{tpu_custom_call.1} parent=39 // pred_region
          %s490 = ssub.s32 128, 128
          %491 = vsyncadd %s482, %s490
          %s492 = smul.addr %s23, 128
          %s493 = scalar_lea.hbm %s5, %s492
          %s495 = sshll.u32 %s485, 4
          %s496 = int_to_ptr.vmem [resolvable:$true] %s495
          %498 = dma.vmem_to_hbm [thread:$0]  %s496, 128, %s493, %s482
        $region56: #{tpu_custom_call.1} parent=39 // pred_fallthru
          _
      $region40: #{tpu_custom_call.1} parent=5 // pred_fallthru
        _
      %p499 = scmp.le.s32.totalorder 2, %s18
      // Predicated region
      $region57: #{tpu_custom_call.1} parent=5 // pred_check
        %p500 = pneg %p499
      $region58: #{tpu_custom_call.1} parent=5 // pred_check_branch
        %502 = sbr.rel (%p500) target = $region60
      $region59: #{tpu_custom_call.1} parent=5 // pred_region
        %s503 = ssub.s32 %s18, 2
        // Predicated region
        $region61: #{tpu_custom_call.1} parent=59 // pred_check
          %p504 = pneg %p157
        $region62: #{tpu_custom_call.1} parent=59 // pred_check_branch
          %506 = sbr.rel (%p504) target = $region64
        $region63: #{tpu_custom_call.1} parent=59 // pred_region
          %s507 = sand.u32 %s142, 1
          %s508 = scalar_lea.sflag [#allocation4], %s507
          %s509 = sand.u32 %s142, 1
          %s510 = smul.addr %s509, 8
          %s511 = scalar_lea.vmem [#allocation8], %s510
          %512 = dma.done %s508, 128
        $region64: #{tpu_custom_call.1} parent=59 // pred_fallthru
          _
      $region60: #{tpu_custom_call.1} parent=5 // pred_fallthru
        _
    $region6: #{tpu_custom_call.1} parent=1 // loop_footer
      %s22 = sadd.s32 1, %s18
    $region7: #{tpu_custom_call.1} parent=1 // loop_footer_branch
      %17 = sbr.rel target = $region3
    $region8: #{tpu_custom_call.1} parent=1 // loop_exit
      _
    %513 = vsyncpa [#allocation3], 1
    %s514 = scalar_lea.sflag [#allocation3], 1
    %515 = vsyncpa %s514, 1
    %516 = vsyncpa [#allocation6], 1
    %517 = vsyncpa [#allocation4], 1
    %s518 = scalar_lea.sflag [#allocation4], 1
    %519 = vsyncpa %s518, 1

</llo_original>
